<compile_context>
chip_gen: v7x
topology: tpu7x:2x2x1
jax: 0.10.0
libtpu: 0.0.40
codegen_flags: <defaults>
</compile_context>

<pallas_src>
import functools
import math

import jax
import jax.numpy as jnp
import numpy as np
from jax import lax
from jax.experimental import pallas as pl
from jax.experimental.pallas import tpu as pltpu

LN_EPS = 1e-5
_DEFAULT_TILE_M = 1024            # row-tile cap for the dense kernels
_ONE_HOT_MAX_HW = 8192            # per-level HW above this -> XLA gather fallback
_ONE_HOT_BUDGET_ELEMS = 1 << 19   # (TLq, HW) f32 intermediates capped at ~2 MiB


def _round_up(x, m):
    return (x + m - 1) // m * m


@functools.lru_cache(maxsize=None)
def _vmem_limit_bytes():
    # Per-generation scoped-VMEM limit: ~100 MiB on v5e/v6e (128 MiB physical),
    # ~52 MiB on v7x (64 MiB physical).  Conservative fallback if the query fails.
    try:
        cap = int(pltpu.get_tpu_info().vmem_capacity_bytes)
    except Exception:
        return 48 * 1024 * 1024
    return int(min(max(cap - 12 * 1024 * 1024, 32 * 1024 * 1024), 100 * 1024 * 1024))


def _cparams(n_parallel=1):
    return pltpu.CompilerParams(
        dimension_semantics=("parallel",) * n_parallel,
        vmem_limit_bytes=_vmem_limit_bytes())


@functools.lru_cache(maxsize=None)
def _single_buffer_supported():
    """Probe once whether pipeline_mode=pl.Buffered(1) lowers cleanly."""
    if not hasattr(pl, "Buffered"):
        return False
    try:
        def _k(x_ref, o_ref):
            o_ref[...] = x_ref[...] + 1.0
        spec = pl.BlockSpec((8, 128), lambda i: (0, 0), pipeline_mode=pl.Buffered(1))
        out = pl.pallas_call(
            _k,
            out_shape=jax.ShapeDtypeStruct((8, 128), jnp.float32),
            grid=(2,),
            in_specs=[spec],
            out_specs=pl.BlockSpec((8, 128), lambda i: (0, 0)),
        )(jnp.zeros((8, 128), jnp.float32))
        jax.block_until_ready(out)
        return True
    except Exception:
        return False


def _resident_spec(shape, index_map):
    """BlockSpec for a grid-invariant (resident) block: single-buffered if possible."""
    if _single_buffer_supported():
        return pl.BlockSpec(shape, index_map, pipeline_mode=pl.Buffered(1))
    return pl.BlockSpec(shape, index_map)


def _pick_tile(m, cap):
    """Largest 16-multiple tile dividing the (16-padded) row count; prefers >=2 steps
    so the 'parallel' axis spans both TensorCores on v7x."""
    g = 16
    mp = _round_up(m, g)
    lim = min(_round_up(max(cap, g), g), mp)
    best, t = g, g
    while t <= lim:
        if mp % t == 0:
            best = t
        t += g
    if mp // best < 2:
        t = best - g
        while t >= g:
            if mp % t == 0 and mp // t >= 2:
                best = t
                break
            t -= g
    return best, mp


# ----------------------------- Pallas kernels -----------------------------

def _layernorm_f32(h, g, b):
    mu = jnp.mean(h, axis=-1, keepdims=True)
    hc = h - mu
    var = jnp.mean(hc * hc, axis=-1, keepdims=True)
    return hc * lax.rsqrt(var + LN_EPS) * g + b


def _to_bf16(x):
    return x if x.dtype == jnp.bfloat16 else x.astype(jnp.bfloat16)


def _linear_kernel(x_ref, w_ref, b_ref, o_ref, *, act):
    acc = jnp.dot(_to_bf16(x_ref[...]), w_ref[...],
                  preferred_element_type=jnp.float32) + b_ref[...]
    if act == "relu":
        acc = jnp.maximum(acc, 0.0)
    o_ref[...] = acc.astype(o_ref.dtype)


def pallas_linear(x, w, b, act=None, out_dtype=jnp.bfloat16, tile_m=None):
    """(M, K) @ (K, N) + b, tiled over rows; bf16 weights stay resident."""
    M, K = x.shape
    N = w.shape[1]
    TM, Mp = _pick_tile(M, tile_m or _DEFAULT_TILE_M)
    xp = x if Mp == M else jnp.pad(x, ((0, Mp - M), (0, 0)))
    out = pl.pallas_call(
        functools.partial(_linear_kernel, act=act),
        out_shape=jax.ShapeDtypeStruct((Mp, N), out_dtype),
        grid=(Mp // TM,),
        in_specs=[pl.BlockSpec((TM, K), lambda i: (i, 0)),
                  _resident_spec((K, N), lambda i: (0, 0)),
                  _resident_spec((1, N), lambda i: (0, 0))],
        out_specs=pl.BlockSpec((TM, N), lambda i: (i, 0)),
        compiler_params=_cparams(1),
    )(xp, w, b.reshape(1, N))
    return out if Mp == M else out[:M]


def _linear_add_ln_kernel(x_ref, r_ref, w_ref, b_ref, g_ref, bb_ref, o_ref):
    y = jnp.dot(_to_bf16(x_ref[...]), w_ref[...],
                preferred_element_type=jnp.float32) + b_ref[...]
    h = r_ref[...].astype(jnp.float32) + y
    o_ref[...] = _layernorm_f32(h, g_ref[...], bb_ref[...]).astype(o_ref.dtype)


def pallas_linear_add_ln(x, res, w, b, gamma, beta, tile_m=None):
    """LayerNorm(res + (x @ w + b)) — fused output-proj + residual + LN."""
    M, K = x.shape
    D = w.shape[1]
    TM, Mp = _pick_tile(M, tile_m or _DEFAULT_TILE_M)
    if Mp != M:
        x = jnp.pad(x, ((0, Mp - M), (0, 0)))
        res = jnp.pad(res, ((0, Mp - M), (0, 0)))
    out = pl.pallas_call(
        _linear_add_ln_kernel,
        out_shape=jax.ShapeDtypeStruct((Mp, D), jnp.bfloat16),
        grid=(Mp // TM,),
        in_specs=[pl.BlockSpec((TM, K), lambda i: (i, 0)),
                  pl.BlockSpec((TM, D), lambda i: (i, 0)),
                  _resident_spec((K, D), lambda i: (0, 0)),
                  _resident_spec((1, D), lambda i: (0, 0)),
                  _resident_spec((1, D), lambda i: (0, 0)),
                  _resident_spec((1, D), lambda i: (0, 0))],
        out_specs=pl.BlockSpec((TM, D), lambda i: (i, 0)),
        compiler_params=_cparams(1),
    )(x, res, w, b.reshape(1, D), gamma.reshape(1, D), beta.reshape(1, D))
    return out if Mp == M else out[:M]


def _ffn_ln_kernel(x_ref, w1_ref, b1_ref, w2_ref, b2_ref, g_ref, bb_ref, o_ref):
    x = _to_bf16(x_ref[...])
    h = jnp.dot(x, w1_ref[...], preferred_element_type=jnp.float32) + b1_ref[...]
    h = jnp.maximum(h, 0.0).astype(jnp.bfloat16)
    y = jnp.dot(h, w2_ref[...], preferred_element_type=jnp.float32) + b2_ref[...]
    o_ref[...] = _layernorm_f32(x.astype(jnp.float32) + y,
                                g_ref[...], bb_ref[...]).astype(o_ref.dtype)


def pallas_ffn_ln(x, w1, b1, w2, b2, gamma, beta):
    """LayerNorm(x + lin2(relu(lin1(x)))) — fused FFN, d_ffn never leaves VMEM."""
    # TODO(synk): at production d_ffn on v7x, add an F grid axis with a VMEM
    # accumulator instead of only shrinking TM.
    M, D = x.shape
    F = w1.shape[1]
    cap = max(64, min(_DEFAULT_TILE_M, ((8 * 1024 * 1024) // (4 * F)) // 16 * 16))
    TM, Mp = _pick_tile(M, cap)
    xp = x if Mp == M else jnp.pad(x, ((0, Mp - M), (0, 0)))
    out = pl.pallas_call(
        _ffn_ln_kernel,
        out_shape=jax.ShapeDtypeStruct((Mp, D), jnp.bfloat16),
        grid=(Mp // TM,),
        in_specs=[pl.BlockSpec((TM, D), lambda i: (i, 0)),
                  _resident_spec((D, F), lambda i: (0, 0)),
                  _resident_spec((1, F), lambda i: (0, 0)),
                  _resident_spec((F, D), lambda i: (0, 0)),
                  _resident_spec((1, D), lambda i: (0, 0)),
                  _resident_spec((1, D), lambda i: (0, 0)),
                  _resident_spec((1, D), lambda i: (0, 0))],
        out_specs=pl.BlockSpec((TM, D), lambda i: (i, 0)),
        compiler_params=_cparams(1),
    )(xp, w1, b1.reshape(1, F), w2, b2.reshape(1, D),
      gamma.reshape(1, D), beta.reshape(1, D))
    return out if Mp == M else out[:M]


def _deform_sample_kernel(v_ref, idx_ref, wgt_ref, o_ref, acc_ref,
                          *, n_heads, dh, n_taps):
    # grid = (batch, Lq-tile, level); the level axis is an "arbitrary" reduction
    # accumulated in f32 VMEM.  For each head: build the (TLq, HW) sampling
    # matrix (bilinear corner weight * validity * attention weight folded into
    # wgt) with an iota compare, contract it in bf16 on the MXU with the full
    # lane-dense value slab, and keep only that head's 32 output lanes.
    lvl = pl.program_id(2)

    @pl.when(lvl == 0)
    def _init():
        acc_ref[...] = jnp.zeros_like(acc_ref)

    v = v_ref[0]                       # (HW, D) bf16
    idx = idx_ref[0]                   # (n_heads, TLq, n_taps) int32 (level-local)
    wgt = wgt_ref[0]                   # (n_heads, TLq, n_taps) f32
    tlq = idx.shape[1]
    hw, d = v.shape
    col = lax.broadcasted_iota(jnp.int32, (tlq, hw), 1)
    lane = lax.broadcasted_iota(jnp.int32, (tlq, d), 1)

    acc = jnp.zeros((tlq, d), jnp.float32)
    for h in range(n_heads):
        s = jnp.zeros((tlq, hw), jnp.float32)
        for j in range(n_taps):        # static unroll: n_points * 4 corners
            s = s + (col == idx[h, :, j:j + 1]).astype(jnp.float32) * wgt[h, :, j:j + 1]
        head_out = jnp.dot(s.astype(jnp.bfloat16), v,
                           preferred_element_type=jnp.float32)   # (TLq, D)
        in_head = (lane >= h * dh) & (lane < (h + 1) * dh)
        acc = acc + jnp.where(in_head, head_out, 0.0)
    acc_ref[...] += acc

    @pl.when(lvl == pl.num_programs(2) - 1)
    def _write():
        o_ref[0] = acc_ref[...].astype(o_ref.dtype)


def _gather_sample_level(v_l, idx, wgt, n_heads, dh):
    # TODO(synk): replace with a Pallas DMA row-gather kernel
    # (PrefetchScalarGridSpec + make_async_copy, double-buffered); also make the
    # one-hot/gather threshold generation-dependent (gather much earlier on v5e).
    B, HW, D = v_l.shape
    _, _, Lq, T = idx.shape
    outs = []
    for h in range(n_heads):
        vh = v_l[:, :, h * dh:(h + 1) * dh].astype(jnp.float32)
        gi = jnp.broadcast_to(idx[:, h].reshape(B, Lq * T)[..., None], (B, Lq * T, dh))
        g = jnp.take_along_axis(vh, gi, axis=1).reshape(B, Lq, T, dh)
        outs.append(jnp.sum(g * wgt[:, h][..., None], axis=2))
    return jnp.concatenate(outs, axis=-1)


def deform_sampling(value, spatial_shapes, sampling_locations, attn_weights, n_heads):
    """value: (B, Lin, D) bf16 (head h = columns [h*Dh,(h+1)*Dh)); locations in [0,1].
    Returns (B, Lq, D) bf16 with MSDeformAttn's head-major feature concat."""
    B, Lin, D = value.shape
    _, Lq, nH, L, P, _ = sampling_locations.shape
    assert nH == n_heads
    dh = D // n_heads
    T = P * 4
    sizes = [h * w for h, w in spatial_shapes]
    starts = np.concatenate([[0], np.cumsum(sizes)]).astype(np.int64)
    hw_pad = _round_up(max(sizes), 8)

    idx_lv, wgt_lv, val_lv = [], [], []
    for lid, (H, W) in enumerate(spatial_shapes):
        loc = sampling_locations[:, :, :, lid]          # (B, Lq, nH, P, 2)
        aw = attn_weights[:, :, :, lid]                 # (B, Lq, nH, P)
        x = loc[..., 0] * W - 0.5                       # grid_sample align_corners=False
        y = loc[..., 1] * H - 0.5
        x0 = jnp.floor(x)
        y0 = jnp.floor(y)
        lw = x - x0
        lh = y - y0
        corners = ((y0, x0, (1.0 - lh) * (1.0 - lw)),
                   (y0, x0 + 1.0, (1.0 - lh) * lw),
                   (y0 + 1.0, x0, lh * (1.0 - lw)),
                   (y0 + 1.0, x0 + 1.0, lh * lw))
        idx_c, wgt_c = [], []
        for yc, xc, wb in corners:
            valid = ((xc >= 0.0) & (xc <= W - 1.0) &
                     (yc >= 0.0) & (yc <= H - 1.0))
            xi = jnp.clip(xc, 0.0, W - 1.0).astype(jnp.int32)
            yi = jnp.clip(yc, 0.0, H - 1.0).astype(jnp.int32)
            idx_c.append(yi * W + xi)
            wgt_c.append(wb * valid.astype(jnp.float32) * aw)
        idx = jnp.transpose(jnp.stack(idx_c, -1), (0, 2, 1, 3, 4)).reshape(B, nH, Lq, T)
        wgt = jnp.transpose(jnp.stack(wgt_c, -1), (0, 2, 1, 3, 4)).reshape(B, nH, Lq, T)
        idx_lv.append(idx)
        wgt_lv.append(wgt)
        val_lv.append(value[:, starts[lid]:starts[lid + 1], :])

    if max(sizes) > _ONE_HOT_MAX_HW:
        acc = None
        for lid in range(L):
            o = _gather_sample_level(val_lv[lid], idx_lv[lid], wgt_lv[lid], n_heads, dh)
            acc = o if acc is None else acc + o
        return acc.astype(jnp.bfloat16)

    # Lq tile bounded so (TLq, HW) f32 intermediates stay a few MiB on any chip.
    cap = max(16, min(512, (_ONE_HOT_BUDGET_ELEMS // hw_pad) // 16 * 16))
    TLq, Lqp = _pick_tile(Lq, cap)
    if Lqp != Lq:
        pad = Lqp - Lq
        idx_lv = [jnp.pad(a, ((0, 0), (0, 0), (0, pad), (0, 0))) for a in idx_lv]
        wgt_lv = [jnp.pad(a, ((0, 0), (0, 0), (0, pad), (0, 0))) for a in wgt_lv]
    val_lv = [v if v.shape[1] == hw_pad else
              jnp.pad(v, ((0, 0), (0, hw_pad - v.shape[1]), (0, 0))) for v in val_lv]
    val_all = jnp.stack(val_lv).reshape(L * B, hw_pad, D)
    idx_all = jnp.stack(idx_lv).reshape(L * B, nH, Lqp, T)
    wgt_all = jnp.stack(wgt_lv).reshape(L * B, nH, Lqp, T)

    out = pl.pallas_call(
        functools.partial(_deform_sample_kernel, n_heads=n_heads, dh=dh, n_taps=T),
        out_shape=jax.ShapeDtypeStruct((B, Lqp, D), jnp.bfloat16),
        grid=(B, Lqp // TLq, L),
        in_specs=[pl.BlockSpec((1, hw_pad, D), lambda b, q, l: (l * B + b, 0, 0)),
                  pl.BlockSpec((1, nH, TLq, T), lambda b, q, l: (l * B + b, 0, q, 0)),
                  pl.BlockSpec((1, nH, TLq, T), lambda b, q, l: (l * B + b, 0, q, 0))],
        out_specs=pl.BlockSpec((1, TLq, D), lambda b, q, l: (b, q, 0)),
        scratch_shapes=[pltpu.VMEM((TLq, D), jnp.float32)],
        compiler_params=pltpu.CompilerParams(
            dimension_semantics=("parallel", "parallel", "arbitrary"),
            vmem_limit_bytes=_vmem_limit_bytes()),
    )(val_all, idx_all, wgt_all)
    return out if Lqp == Lq else out[:, :Lq]


# ----------------------------- position embeds ----------------------------

def pos_embed_sine(mask, num_pos_feats, temperature=10000.0):
    not_mask = (~mask).astype(jnp.float32)
    y_embed = jnp.cumsum(not_mask, axis=1)
    x_embed = jnp.cumsum(not_mask, axis=2)
    eps = 1e-6
    scale = 2.0 * math.pi
    y_embed = y_embed / (y_embed[:, -1:, :] + eps) * scale
    x_embed = x_embed / (x_embed[:, :, -1:] + eps) * scale
    dim_t = jnp.arange(num_pos_feats, dtype=jnp.float32)
    dim_t = temperature ** (2.0 * jnp.floor(dim_t / 2.0) / num_pos_feats)
    pos_x = x_embed[..., None] / dim_t
    pos_y = y_embed[..., None] / dim_t
    B, H, W = mask.shape
    pos_x = jnp.stack([jnp.sin(pos_x[..., 0::2]), jnp.cos(pos_x[..., 1::2])],
                      axis=4).reshape(B, H, W, num_pos_feats)
    pos_y = jnp.stack([jnp.sin(pos_y[..., 0::2]), jnp.cos(pos_y[..., 1::2])],
                      axis=4).reshape(B, H, W, num_pos_feats)
    pos = jnp.concatenate([pos_y, pos_x], axis=3)
    return jnp.transpose(pos, (0, 3, 1, 2))


def pos_embed_learned(mask, row_embed, col_embed):
    B, H, W = mask.shape
    half = row_embed.shape[-1]
    x_emb = jnp.broadcast_to(col_embed[None, :W, :], (H, W, half))
    y_emb = jnp.broadcast_to(row_embed[:H, None, :], (H, W, half))
    pos = jnp.concatenate([x_emb, y_emb], axis=-1)
    pos = jnp.transpose(pos, (2, 0, 1))[None]
    return jnp.broadcast_to(pos, (B,) + pos.shape[1:])


# ----------------------------- deformable attn ----------------------------

def ms_deform_attn_core_output(p, query, reference_points, input_flatten,
                               spatial_shapes, padding_mask):
    """MSDeformAttn up to (excluding) the output projection (fused later)."""
    n_heads, n_levels, n_points = p["n_heads"], p["n_levels"], p["n_points"]
    B, Lq, D = query.shape
    _, Lin, _ = input_flatten.shape

    value = pallas_linear(input_flatten.reshape(B * Lin, D), p["val_w"], p["val_b"],
                          out_dtype=jnp.bfloat16).reshape(B, Lin, D)
    if padding_mask is not None:
        value = jnp.where(padding_mask[..., None], jnp.zeros((), value.dtype), value)

    # fused (offsets | attention logits) projection (pre-padded lane-dense at init)
    no, na = p["n_off"], p["n_attn"]
    qa = pallas_linear(query.reshape(B * Lq, D), p["qa_w"], p["qa_b"],
                       out_dtype=jnp.float32)
    offsets = qa[:, :no].reshape(B, Lq, n_heads, n_levels, n_points, 2)
    attn = qa[:, no:no + na].reshape(B, Lq, n_heads, n_levels * n_points)
    attn = jax.nn.softmax(attn, axis=-1).reshape(B, Lq, n_heads, n_levels, n_points)
    # TODO(synk): fuse the softmax + reference-point affine into the qa kernel.

    shapes_arr = jnp.asarray(spatial_shapes, dtype=jnp.float32)        # (L,2)(H,W)
    offset_norm = jnp.stack([shapes_arr[:, 1], shapes_arr[:, 0]], -1)  # (L,2)(W,H)
    sampling_locations = (reference_points[:, :, None, :, None, :]
                          + offsets / offset_norm[None, None, None, :, None, :])
    return deform_sampling(value, spatial_shapes, sampling_locations, attn, n_heads)


# ----------------------------- layers --------------------------------------

def _attn_block(attn_p, norm_g, norm_b, query, residual, reference_points,
                input_flatten, spatial_shapes, padding_mask):
    B, Lq, D = query.shape
    core = ms_deform_attn_core_output(attn_p, query, reference_points,
                                      input_flatten, spatial_shapes, padding_mask)
    out = pallas_linear_add_ln(core.reshape(B * Lq, D),
                               residual.reshape(B * Lq, D),
                               attn_p["out_w"], attn_p["out_b"], norm_g, norm_b)
    return out.reshape(B, Lq, D)


def _ffn_block(p, x, g_key, b_key):
    B, L, D = x.shape
    out = pallas_ffn_ln(x.reshape(B * L, D), p["lin1_w"], p["lin1_b"],
                        p["lin2_w"], p["lin2_b"], p[g_key], p[b_key])
    return out.reshape(B, L, D)


def encoder_layer_forward(p, src, pos, ref, spatial_shapes, padding_mask):
    src = _attn_block(p["self_attn"], p["norm1_g"], p["norm1_b"],
                      src + pos, src, ref, src, spatial_shapes, padding_mask)
    return _ffn_block(p, src, "norm2_g", "norm2_b")


def decoder_layer_forward(p, tgt, src, tgt_pos, tgt_ref, t2s_ref,
                          tgt_shapes, src_shapes, tgt_mask, src_mask):
    tgt = _attn_block(p["self_attn"], p["norm2_g"], p["norm2_b"],
                      tgt + tgt_pos, tgt, tgt_ref, tgt, tgt_shapes, tgt_mask)
    tgt = _attn_block(p["cross_attn"], p["norm1_g"], p["norm1_b"],
                      tgt + tgt_pos, tgt, t2s_ref, src, src_shapes, src_mask)
    return _ffn_block(p, tgt, "norm3_g", "norm3_b")


# ----------------------------- reference points ----------------------------

def get_valid_ratio(mask):
    _, H, W = mask.shape
    valid_h = jnp.sum(~mask[:, :, 0], axis=1).astype(jnp.float32)
    valid_w = jnp.sum(~mask[:, 0, :], axis=1).astype(jnp.float32)
    return jnp.stack([valid_w / W, valid_h / H], axis=-1)


def get_reference_points(spatial_shapes, valid_ratios):
    ref_list = []
    for lvl, (H, W) in enumerate(spatial_shapes):
        ref_y, ref_x = jnp.meshgrid(
            jnp.linspace(0.5, H - 0.5, H, dtype=jnp.float32),
            jnp.linspace(0.5, W - 0.5, W, dtype=jnp.float32),
            indexing="ij")
        ref_y = ref_y.reshape(-1)[None] / (valid_ratios[:, None, lvl, 1] * H)
        ref_x = ref_x.reshape(-1)[None] / (valid_ratios[:, None, lvl, 0] * W)
        ref_list.append(jnp.stack([ref_x, ref_y], axis=-1))
    reference_points = jnp.concatenate(ref_list, axis=1)
    reference_points = reference_points[:, :, None] * valid_ratios[:, None]
    return reference_points


# ----------------------------- full model ----------------------------------

def encoder_forward(layers, src, spatial_shapes, valid_ratios, pos, mask):
    ref = get_reference_points(spatial_shapes, valid_ratios)
    out = src
    for p in layers:
        out = encoder_layer_forward(p, out, pos, ref, spatial_shapes, mask)
    return out


def decoder_forward(layers, tgt, src, tgt_pos, t2s_ref_base, tgt_shapes,
                    src_shapes, tgt_valid_ratios, src_valid_ratios,
                    tgt_mask, src_mask):
    tgt_ref = get_reference_points(tgt_shapes, tgt_valid_ratios)
    t2s_ref = t2s_ref_base[:, :, None] * src_valid_ratios[:, None]
    out = tgt
    for p in layers:
        out = decoder_layer_forward(p, out, src, tgt_pos, tgt_ref, t2s_ref,
                                    tgt_shapes, src_shapes, tgt_mask, src_mask)
    return out[None]  # (1, B, Lt, D) — return_intermediate_dec=False


def deform_transformer_forward(params, srcs, cfg):
    d_model = cfg["d_model"]
    B = srcs[0].shape[0]

    src_flat, mask_flat, pos_flat, spatial_shapes, src_masks = [], [], [], [], []
    for i, x in enumerate(srcs):
        b, c, h, w = x.shape
        spatial_shapes.append((h, w))
        mask = jnp.zeros((b, h, w), dtype=bool)
        src_masks.append(mask)
        pos = pos_embed_sine(mask, d_model // 2)                 # (B, D, H, W)
        pos = pos + params["lvl_embed"][i].reshape(1, -1, 1, 1)
        x_tok = jnp.transpose(x, (0, 2, 3, 1)).reshape(b * h * w, c)
        proj = pallas_linear(x_tok, params["proj_w"][i], params["proj_b"][i],
                             out_dtype=jnp.bfloat16).reshape(b, h * w, d_model)
        pos_tok = jnp.transpose(pos, (0, 2, 3, 1)).reshape(b, h * w, d_model)
        pos_tok = pos_tok.astype(jnp.bfloat16)
        src_flat.append(proj + pos_tok)
        pos_flat.append(pos_tok)
        mask_flat.append(mask.reshape(b, h * w))

    src = jnp.concatenate(src_flat, axis=1)
    src_mask = jnp.concatenate(mask_flat, axis=1)
    src_pos = jnp.concatenate(pos_flat, axis=1)
    src_spatial_shapes = tuple(spatial_shapes)
    src_valid_ratios = jnp.stack([get_valid_ratio(m) for m in src_masks], 1)

    memory = encoder_forward(params["enc_layers"], src, src_spatial_shapes,
                             src_valid_ratios, src_pos, src_mask)

    Ht, Wt = cfg["tgt_shape"]
    tgt_mask = jnp.zeros((B, Ht, Wt), dtype=bool)
    tgt_pos = pos_embed_learned(tgt_mask, params["tgt_row_embed"],
                                params["tgt_col_embed"])          # (B, D, Ht, Wt)
    tgt_pos = jnp.transpose(tgt_pos, (0, 2, 3, 1)).reshape(B, Ht * Wt, d_model)
    tgt_pos = tgt_pos.astype(jnp.bfloat16)
    tgt = tgt_pos
    tgt_spatial_shapes = ((Ht, Wt),)
    tgt_valid_ratios = get_valid_ratio(tgt_mask)[:, None]
    tgt_mask_flat = tgt_mask.reshape(B, Ht * Wt)

    # t2s head (weights pre-padded to a lane-dense 128 at init)
    t2s = pallas_linear(tgt.reshape(-1, d_model), params["t2s_w"], params["t2s_b"],
                        out_dtype=jnp.float32)[:, :2]
    t2s_ref = jax.nn.sigmoid(t2s).reshape(B, Ht * Wt, 2)

    hs = decoder_forward(params["dec_layers"], tgt, memory, tgt_pos, t2s_ref,
                         tgt_spatial_shapes, src_spatial_shapes,
                         tgt_valid_ratios, src_valid_ratios,
                         tgt_mask_flat, src_mask)
    # (1, B, Lt, D) -> transpose(2,3) -> (1, B, D, Ht, Wt) -> tuple
    hs = jnp.transpose(hs, (0, 1, 3, 2)).reshape(hs.shape[0], B, d_model, Ht, Wt)
    hs = hs.astype(jnp.float32)
    return tuple(hs[i] for i in range(hs.shape[0]))


# ----------------------------- parameter init ------------------------------

def xavier_uniform(key, shape, gain=1.0):
    fan_in, fan_out = shape[0], shape[1]
    a = gain * math.sqrt(6.0 / (fan_in + fan_out))
    return jax.random.uniform(key, shape, jnp.float32, -a, a)


def init_msdeform_attn(key, d_model, n_levels, n_heads, n_points):
    k1, k2 = jax.random.split(key)
    thetas = jnp.arange(n_heads, dtype=jnp.float32) * (2.0 * math.pi / n_heads)
    grid_init = jnp.stack([jnp.cos(thetas), jnp.sin(thetas)], axis=-1)
    grid_init = grid_init / jnp.max(jnp.abs(grid_init), axis=-1, keepdims=True)
    grid_init = jnp.tile(grid_init[:, None, None, :], (1, n_levels, n_points, 1))
    grid_init = grid_init * jnp.arange(1, n_points + 1,
                                       dtype=jnp.float32).reshape(1, 1, n_points, 1)
    no = n_heads * n_levels * n_points * 2
    na = n_heads * n_levels * n_points
    n_pad = _round_up(no + na, 128)
    # fused (sampling_offsets | attention_weights) projection: both weight blocks
    # are zero-initialized (per the torch reset); pre-padded + bf16 once at init.
    qa_w = jnp.zeros((d_model, n_pad), jnp.bfloat16)
    qa_b = jnp.zeros((n_pad,), jnp.float32).at[:no].set(grid_init.reshape(-1))
    return {
        "qa_w": qa_w, "qa_b": qa_b, "n_off": no, "n_attn": na,
        "val_w": xavier_uniform(k1, (d_model, d_model)).astype(jnp.bfloat16),
        "val_b": jnp.zeros((d_model,), jnp.float32),
        "out_w": xavier_uniform(k2, (d_model, d_model)).astype(jnp.bfloat16),
        "out_b": jnp.zeros((d_model,), jnp.float32),
        "n_levels": n_levels, "n_heads": n_heads, "n_points": n_points,
    }


def init_encoder_layer(key, d_model, d_ffn, n_levels, n_heads, n_points):
    ks = jax.random.split(key, 3)
    return {
        "self_attn": init_msdeform_attn(ks[0], d_model, n_levels, n_heads, n_points),
        "norm1_g": jnp.ones((d_model,), jnp.float32),
        "norm1_b": jnp.zeros((d_model,), jnp.float32),
        "lin1_w": xavier_uniform(ks[1], (d_model, d_ffn)).astype(jnp.bfloat16),
        "lin1_b": jnp.zeros((d_ffn,), jnp.float32),
        "lin2_w": xavier_uniform(ks[2], (d_ffn, d_model)).astype(jnp.bfloat16),
        "lin2_b": jnp.zeros((d_model,), jnp.float32),
        "norm2_g": jnp.ones((d_model,), jnp.float32),
        "norm2_b": jnp.zeros((d_model,), jnp.float32),
    }


def init_decoder_layer(key, d_model, d_ffn, n_levels, n_heads, n_points):
    ks = jax.random.split(key, 4)
    return {
        "cross_attn": init_msdeform_attn(ks[0], d_model, n_levels, n_heads, n_points),
        "self_attn": init_msdeform_attn(ks[1], d_model, 1, n_heads, n_points),
        "norm1_g": jnp.ones((d_model,), jnp.float32),
        "norm1_b": jnp.zeros((d_model,), jnp.float32),
        "norm2_g": jnp.ones((d_model,), jnp.float32),
        "norm2_b": jnp.zeros((d_model,), jnp.float32),
        "lin1_w": xavier_uniform(ks[2], (d_model, d_ffn)).astype(jnp.bfloat16),
        "lin1_b": jnp.zeros((d_ffn,), jnp.float32),
        "lin2_w": xavier_uniform(ks[3], (d_ffn, d_model)).astype(jnp.bfloat16),
        "lin2_b": jnp.zeros((d_model,), jnp.float32),
        "norm3_g": jnp.ones((d_model,), jnp.float32),
        "norm3_b": jnp.zeros((d_model,), jnp.float32),
    }


def init_params(key, cfg):
    d = cfg["d_model"]
    n_levels = len(cfg["in_channels"])
    keys = jax.random.split(key, 8)
    Ht, Wt = cfg["tgt_shape"]
    t2s_w = jnp.pad(xavier_uniform(keys[4], (d, 2)), ((0, 0), (0, 126)))
    return {
        "proj_w": [xavier_uniform(jax.random.fold_in(keys[0], i),
                                  (c, d)).astype(jnp.bfloat16)
                   for i, c in enumerate(cfg["in_channels"])],
        "proj_b": [jnp.zeros((d,), jnp.float32) for _ in cfg["in_channels"]],
        "lvl_embed": xavier_uniform(keys[1], (n_levels, d)),
        "tgt_row_embed": xavier_uniform(keys[2], (Ht, d // 2)),
        "tgt_col_embed": xavier_uniform(keys[3], (Wt, d // 2)),
        "t2s_w": t2s_w.astype(jnp.bfloat16),
        "t2s_b": jnp.zeros((128,), jnp.float32),
        "enc_layers": [init_encoder_layer(jax.random.fold_in(keys[5], i), d,
                                          cfg["dim_feedforward"], n_levels,
                                          cfg["n_heads"], cfg["enc_n_points"])
                       for i in range(cfg["num_encoder_layers"])],
        "dec_layers": [init_decoder_layer(jax.random.fold_in(keys[6], i), d,
                                          cfg["dim_feedforward"], n_levels,
                                          cfg["n_heads"], cfg["dec_n_points"])
                       for i in range(cfg["num_decoder_layers"])],
    }


# ----------------------------- main ----------------------------------------

if __name__ == "__main__":
    cfg = dict(
        in_channels=[4],         # single feature level
        d_model=128,             # lane-dense feature dim
        n_heads=4,
        num_encoder_layers=2,
        num_decoder_layers=2,
        dim_feedforward=256,
        enc_n_points=2,
        dec_n_points=2,
        tgt_shape=(8, 8),
    )
    root = jax.random.PRNGKey(0)
    k_param, k_input = jax.random.split(root)
    params = init_params(k_param, cfg)
    srcs = [jax.random.normal(k_input, (2, 4, 16, 16), jnp.float32)]  # NCHW

    out = deform_transformer_forward(params, srcs, cfg)
    out = jax.block_until_ready(out)

    assert isinstance(out, tuple) and len(out) == 1
    assert out[0].shape == (2, cfg["d_model"], *cfg["tgt_shape"])
    assert bool(jnp.all(jnp.isfinite(out[0])))
    print("KERNEL_OK")
</pallas_src>

<mosaic_0001>
module attributes {stable_mosaic.version = 11 : i64} {
  func.func @_k(%arg0: i32, %arg1: memref<8x128xf32, #tpu.memory_space<vmem>>, %arg2: memref<8x128xf32, #tpu.memory_space<vmem>>) attributes {dimension_semantics = [#tpu.dimension_semantics<arbitrary>], iteration_bounds = array<i64: 2>, scalar_prefetch = 0 : i64, scratch_operands = 0 : i64, tpu.core_type = #tpu.core_type<tc>, window_params = [{pipeline_mode = #tpu.pipeline_mode<synchronous>, transform_indices = @transform_0, window_bounds = array<i64: 8, 128>}, {pipeline_mode = #tpu.pipeline_mode<synchronous>, transform_indices = @transform_1, window_bounds = array<i64: 8, 128>}]} {
    %c0 = arith.constant 0 : index
    %c0_0 = arith.constant 0 : index
    %0 = vector.load %arg1[%c0, %c0_0] : memref<8x128xf32, #tpu.memory_space<vmem>>, vector<8x128xf32>
    %cst = arith.constant 1.000000e+00 : f32
    %1 = vector.broadcast %cst : f32 to vector<8x128xf32>
    %2 = arith.addf %0, %1 : vector<8x128xf32>
    %c0_1 = arith.constant 0 : index
    %c0_2 = arith.constant 0 : index
    %3 = vector.load %arg2[%c0_1, %c0_2] : memref<8x128xf32, #tpu.memory_space<vmem>>, vector<8x128xf32>
    tpu.vector_store %arg2[%c0_1, %c0_2], %2 {strides = array<i32>} : memref<8x128xf32, #tpu.memory_space<vmem>>, vector<8x128xf32>,
    return
  }
  func.func @transform_0(%arg0: i32) -> (i32, i32) {
    %c0_i32 = arith.constant 0 : i32
    %c0_i32_0 = arith.constant 0 : i32
    %c0_i32_1 = arith.constant 0 : i32
    return %c0_i32, %c0_i32_0 : i32, i32
  }
  func.func @transform_1(%arg0: i32) -> (i32, i32) {
    %c0_i32 = arith.constant 0 : i32
    %c0_i32_0 = arith.constant 0 : i32
    %c0_i32_1 = arith.constant 0 : i32
    return %c0_i32, %c0_i32_0 : i32, i32
  }
}

module attributes {stable_mosaic.version = 11 : i64} {
  func.func @_linear_kernel(%arg0: i32, %arg1: memref<256x4xf32, #tpu.memory_space<vmem>>, %arg2: memref<4x128xbf16, #tpu.memory_space<vmem>>, %arg3: memref<1x128xf32, #tpu.memory_space<vmem>>, %arg4: memref<256x128xbf16, #tpu.memory_space<vmem>>) attributes {dimension_semantics = [#tpu.dimension_semantics<parallel>], iteration_bounds = array<i64: 2>, scalar_prefetch = 0 : i64, scratch_operands = 0 : i64, tpu.core_type = #tpu.core_type<tc>, window_params = [{transform_indices = @transform_0, window_bounds = array<i64: 256, 4>}, {pipeline_mode = #tpu.pipeline_mode<synchronous>, transform_indices = @transform_1, window_bounds = array<i64: 4, 128>}, {pipeline_mode = #tpu.pipeline_mode<synchronous>, transform_indices = @transform_2, window_bounds = array<i64: 1, 128>}, {transform_indices = @transform_3, window_bounds = array<i64: 256, 128>}]} {
    %c0 = arith.constant 0 : index
    %c0_0 = arith.constant 0 : index
    %0 = vector.load %arg1[%c0, %c0_0] : memref<256x4xf32, #tpu.memory_space<vmem>>, vector<256x4xf32>
    %1 = arith.truncf %0 : vector<256x4xf32> to vector<256x4xbf16>
    %c0_1 = arith.constant 0 : index
    %c0_2 = arith.constant 0 : index
    %2 = vector.load %arg2[%c0_1, %c0_2] : memref<4x128xbf16, #tpu.memory_space<vmem>>, vector<4x128xbf16>
    %cst = arith.constant dense<0.000000e+00> : vector<256x128xf32>
    %3 = tpu.matmul %1, %2, %cst {dimension_numbers = #tpu.dot_dimension_numbers<[1], [0], [0], [1], [0, 0, 1, 1], [], []>} : vector<256x4xbf16>, vector<4x128xbf16>, vector<256x128xf32> -> vector<256x128xf32>
    %c0_3 = arith.constant 0 : index
    %c0_4 = arith.constant 0 : index
    %4 = vector.load %arg3[%c0_3, %c0_4] : memref<1x128xf32, #tpu.memory_space<vmem>>, vector<1x128xf32>
    %5 = vector.broadcast %4 : vector<1x128xf32> to vector<256x128xf32>
    %6 = arith.addf %3, %5 : vector<256x128xf32>
    %7 = arith.truncf %6 : vector<256x128xf32> to vector<256x128xbf16>
    %c0_5 = arith.constant 0 : index
    %c0_6 = arith.constant 0 : index
    %8 = vector.load %arg4[%c0_5, %c0_6] : memref<256x128xbf16, #tpu.memory_space<vmem>>, vector<256x128xbf16>
    tpu.vector_store %arg4[%c0_5, %c0_6], %7 {strides = array<i32>} : memref<256x128xbf16, #tpu.memory_space<vmem>>, vector<256x128xbf16>,
    return
  }
  func.func @transform_0(%arg0: i32) -> (i32, i32) {
    %c0_i32 = arith.constant 0 : i32
    %c0_i32_0 = arith.constant 0 : i32
    return %arg0, %c0_i32 : i32, i32
  }
  func.func @transform_1(%arg0: i32) -> (i32, i32) {
    %c0_i32 = arith.constant 0 : i32
    %c0_i32_0 = arith.constant 0 : i32
    %c0_i32_1 = arith.constant 0 : i32
    return %c0_i32, %c0_i32_0 : i32, i32
  }
  func.func @transform_2(%arg0: i32) -> (i32, i32) {
    %c0_i32 = arith.constant 0 : i32
    %c0_i32_0 = arith.constant 0 : i32
    %c0_i32_1 = arith.constant 0 : i32
    return %c0_i32, %c0_i32_0 : i32, i32
  }
  func.func @transform_3(%arg0: i32) -> (i32, i32) {
    %c0_i32 = arith.constant 0 : i32
    %c0_i32_0 = arith.constant 0 : i32
    return %arg0, %c0_i32 : i32, i32
  }
}

</mosaic_0001>

<llo_original>
// kernel: tpu_custom_call.1
$region0: #{tpu_custom_call.1}
  #allocation0 [shape = 'u32[]', space=smem, size = 0x4, offset = 0x4, fixed_abs, tag = 'smem constant byte address 0x4 - core index']
  #allocation1 [shape = 'u32[144,128]{1,0:T(1,128)}', space=vmem, size = 0x12000, scoped, tag = 'internal scratch']
  %s0 = inlined_call_operand.hbm [shape: f32[8,128], index: 0, kind: input, shape index: {}]
  %s1 = inlined_call_operand.hbm [shape: f32[8,128], index: 1, kind: output, shape index: {}]
  %s2 = sld [smem:[#allocation0]]
  $region41: #{tpu_custom_call.1} parent=0
    _
  %s4 = ssub.s32 1, %s2
  %s5 = scalar_select 0, %s4, %s2
  $region1: #{tpu_custom_call.1} parent=0
    #allocation2 [shape = 'u8[4096]{0}', space=vmem, size = 0x1000, scoped, tag = 'input window, operand 0, single buffered']
    #allocation3 [shape = 's32[2]{0}', space=sflag, size = 0x8, scoped, tag = 'scoped memory for tpu_custom_call.1']
    #allocation4 [shape = 's32[2]{0}', space=sflag, size = 0x8, scoped, tag = 'scoped memory for tpu_custom_call.1']
    #allocation5 [shape = 'u8[4096]{0}', space=vmem, size = 0x1000, scoped, tag = 'output window, operand 0, single buffered']
    %6 = vsyncpa [#allocation3], 0
    %7 = vsyncpa [#allocation4], 0
    loop: start=0, step=1, limit=4
    $region2: #{tpu_custom_call.1} parent=1 // loop_pre_header
      _
    $region3: #{tpu_custom_call.1} parent=1 // loop_header
      %s9 = sphi 0, %s13
      %p10 = scmp.ge.s32.totalorder %s9, 4
      %s17 = sphi 0, %s17
      %s19 = sphi 0, %s17
      %s20 = sphi 0, %s19
      %s34 = sphi 0, %s20
      %s38 = sphi 0, %s38
      %s40 = sphi 0, %s38
      %s41 = sphi 0, %s40
      %s55 = sphi 0, %s41
    $region4: #{tpu_custom_call.1} parent=1 // loop_header_branch
      %12 = sbr.rel (%p10) target = $region8
    $region5: #{tpu_custom_call.1} parent=1 // loop_body
      %s14 = ssub.s32 %s9, 1
      %s15 = ssub.s32 %s9, 2
      %s16 = sadd.s32 %s9, 1
      %s18 = sadd.s32 %s17, 1
      %p21 = scmp.eq.s32.totalorder %s9, 1
      %p22 = scmp.ne.s32.totalorder %s17, %s19
      %p23 = scmp.eq.s32.totalorder %s9, 0
      %p24 = por %p22, %p23
      %p25 = scmp.ne.s32.totalorder %s17, %s19
      %p26 = scmp.eq.s32.totalorder %s14, 1
      %p27 = por %p25, %p26
      %p28 = scmp.ne.s32.totalorder %s19, %s20
      %p29 = scmp.eq.s32.totalorder %s14, 0
      %p30 = por %p28, %p29
      %p31 = scmp.ne.s32.totalorder %s19, %s20
      %p32 = scmp.eq.s32.totalorder %s15, 1
      %p33 = por %p31, %p32
      %p35 = scmp.ne.s32.totalorder %s20, %s34
      %p36 = scmp.eq.s32.totalorder %s15, 0
      %p37 = por %p35, %p36
      %s39 = sadd.s32 %s38, 1
      %p42 = scmp.eq.s32.totalorder %s9, 1
      %p43 = scmp.ne.s32.totalorder %s38, %s40
      %p44 = scmp.eq.s32.totalorder %s9, 0
      %p45 = por %p43, %p44
      %p46 = scmp.ne.s32.totalorder %s38, %s40
      %p47 = scmp.eq.s32.totalorder %s14, 1
      %p48 = por %p46, %p47
      %p49 = scmp.ne.s32.totalorder %s40, %s41
      %p50 = scmp.eq.s32.totalorder %s14, 0
      %p51 = por %p49, %p50
      %p52 = scmp.ne.s32.totalorder %s40, %s41
      %p53 = scmp.eq.s32.totalorder %s15, 1
      %p54 = por %p52, %p53
      %p56 = scmp.ne.s32.totalorder %s41, %s55
      %p57 = scmp.eq.s32.totalorder %s15, 0
      %p58 = por %p56, %p57
      %p59 = scmp.le.s32.totalorder 1, %s9
      %p60 = scmp.lt.s32.totalorder %s9, 3
      %p61 = pnand %p59, %p60
      %p62 = pneg %p61
      // Predicated region
      $region9: #{tpu_custom_call.1} parent=5 // pred_check
        _
      $region10: #{tpu_custom_call.1} parent=5 // pred_check_branch
        %64 = sbr.rel (%p61) target = $region12
      $region11: #{tpu_custom_call.1} parent=5 // pred_region
        %s65 = ssub.s32 %s9, 1
        // Predicated region
        $region13: #{tpu_custom_call.1} parent=11 // pred_check
          %p66 = pneg %p30
        $region14: #{tpu_custom_call.1} parent=11 // pred_check_branch
          %68 = sbr.rel (%p66) target = $region16
        $region15: #{tpu_custom_call.1} parent=11 // pred_region
          %s70 = ssub.s32 128, 128
          %71 = vsyncadd [#allocation3], %s70
          %s73 = sshll.u32 [#allocation2], 4
          %s74 = int_to_ptr.vmem [resolvable:$true] %s73
          %76 = dma.hbm_to_vmem [thread:$0]  %s0, 128, %s74, [#allocation3]
        $region16: #{tpu_custom_call.1} parent=11 // pred_fallthru
          _
      $region12: #{tpu_custom_call.1} parent=5 // pred_fallthru
        _
      %p77 = scmp.lt.s32.totalorder %s9, 2
      // Predicated region
      $region17: #{tpu_custom_call.1} parent=5 // pred_check
        %p78 = pneg %p77
      $region18: #{tpu_custom_call.1} parent=5 // pred_check_branch
        %80 = sbr.rel (%p78) target = $region20
      $region19: #{tpu_custom_call.1} parent=5 // pred_region
        _
      $region20: #{tpu_custom_call.1} parent=5 // pred_fallthru
        _
      %p81 = scmp.le.s32.totalorder 1, %s9
      %p82 = scmp.lt.s32.totalorder %s9, 3
      %p83 = pnand %p81, %p82
      %p84 = pneg %p83
      // Predicated region
      $region21: #{tpu_custom_call.1} parent=5 // pred_check
        _
      $region22: #{tpu_custom_call.1} parent=5 // pred_check_branch
        %86 = sbr.rel (%p83) target = $region24
      $region23: #{tpu_custom_call.1} parent=5 // pred_region
        %s87 = ssub.s32 %s9, 1
        // Predicated region
        $region25: #{tpu_custom_call.1} parent=23 // pred_check
          %p88 = pneg %p30
        $region26: #{tpu_custom_call.1} parent=23 // pred_check_branch
          %90 = sbr.rel (%p88) target = $region28
        $region27: #{tpu_custom_call.1} parent=23 // pred_region
          %91 = dma.done [#allocation3], 128
        $region28: #{tpu_custom_call.1} parent=23 // pred_fallthru
          _
        %p92 = pneg %p30
        %p93 = pneg %p27
        %p94 = pneg %p51
        %p95 = pneg %p48
        %v96 = vld [vmem:[#allocation2] sm:$0xff]
        %v97 = vadd.f32 %v96, 1.0
        %98 = vst [vmem:[#allocation5] sm:$0xff] %v97
        // Predicated region
        $region29: #{tpu_custom_call.1} parent=23 // pred_check
          %p99 = pneg %p48
        $region30: #{tpu_custom_call.1} parent=23 // pred_check_branch
          %101 = sbr.rel (%p99) target = $region32
        $region31: #{tpu_custom_call.1} parent=23 // pred_region
          %s103 = ssub.s32 128, 128
          %104 = vsyncadd [#allocation4], %s103
          %s106 = sshll.u32 [#allocation5], 4
          %s107 = int_to_ptr.vmem [resolvable:$true] %s106
          %109 = dma.vmem_to_hbm [thread:$0]  %s107, 128, %s1, [#allocation4]
        $region32: #{tpu_custom_call.1} parent=23 // pred_fallthru
          _
        // Predicated region
        $region33: #{tpu_custom_call.1} parent=23 // pred_check
          %p110 = pneg %p48
        $region34: #{tpu_custom_call.1} parent=23 // pred_check_branch
          %112 = sbr.rel (%p110) target = $region36
        $region35: #{tpu_custom_call.1} parent=23 // pred_region
          %113 = dma.done [#allocation4], 128
        $region36: #{tpu_custom_call.1} parent=23 // pred_fallthru
          _
      $region24: #{tpu_custom_call.1} parent=5 // pred_fallthru
        _
      %p114 = scmp.le.s32.totalorder 2, %s9
      // Predicated region
      $region37: #{tpu_custom_call.1} parent=5 // pred_check
        %p115 = pneg %p114
      $region38: #{tpu_custom_call.1} parent=5 // pred_check_branch
        %117 = sbr.rel (%p115) target = $region40
      $region39: #{tpu_custom_call.1} parent=5 // pred_region
        %s118 = ssub.s32 %s9, 2
      $region40: #{tpu_custom_call.1} parent=5 // pred_fallthru
        _
    $region6: #{tpu_custom_call.1} parent=1 // loop_footer
      %s13 = sadd.s32 1, %s9
    $region7: #{tpu_custom_call.1} parent=1 // loop_footer_branch
      %8 = sbr.rel target = $region3
    $region8: #{tpu_custom_call.1} parent=1 // loop_exit
      _
    %119 = vsyncpa [#allocation3], 1
    %s120 = scalar_lea.sflag [#allocation3], 1
    %121 = vsyncpa %s120, 1
    %122 = vsyncpa [#allocation4], 1
    %s123 = scalar_lea.sflag [#allocation4], 1
    %124 = vsyncpa %s123, 1

// kernel: tpu_custom_call.1
$region0: #{tpu_custom_call.1}
  #allocation0 [shape = 'u32[]', space=smem, size = 0x4, offset = 0x4, fixed_abs, tag = 'smem constant byte address 0x4 - core index']
  #allocation1 [shape = 'u32[144,128]{1,0:T(1,128)}', space=vmem, size = 0x12000, scoped, tag = 'internal scratch']
  %s0 = inlined_call_operand.vmem [shape: f32[512,4], index: 0, kind: input, shape index: {}]
  %s1 = inlined_call_operand.vmem [shape: bf16[4,128], index: 1, kind: input, shape index: {}]
  %s2 = inlined_call_operand.vmem [shape: f32[1,128], index: 2, kind: input, shape index: {}]
  %s3 = inlined_call_operand.hbm [shape: bf16[512,128], index: 3, kind: output, shape index: {}]
  %s4 = sld [smem:[#allocation0]]
  $region45: #{tpu_custom_call.1} parent=0
    _
  %s6 = ssub.s32 1, %s4
  %s7 = scalar_select 0, %s6, %s4
  $region1: #{tpu_custom_call.1} parent=0
    #allocation2 [shape = 'u8[131072]{0}', space=vmem, size = 0x20000, scoped, tag = 'output window, operand 0']
    #allocation3 [shape = 's32[2]{0}', space=sflag, size = 0x8, scoped, tag = 'scoped memory for tpu_custom_call.1']
    %8 = vsyncpa [#allocation3], 0
    %s9 = scalar_lea.sflag [#allocation3], 1
    %10 = vsyncpa %s9, 0
    loop: start=0, step=1, limit=4
    $region2: #{tpu_custom_call.1} parent=1 // loop_pre_header
      _
    $region3: #{tpu_custom_call.1} parent=1 // loop_header
      %s12 = sphi 0, %s16
      %p13 = scmp.ge.s32.totalorder %s12, 4
      %s22 = sphi 0, %s24
      %s25 = sphi 0, %s22
      %s26 = sphi 0, %s25
      %s42 = sphi 0, %s26
      %s46 = sphi 0, %s46
      %s48 = sphi 0, %s46
      %s49 = sphi 0, %s48
      %s63 = sphi 0, %s49
      %s67 = sphi 0, %s67
      %s69 = sphi 0, %s67
      %s70 = sphi 0, %s69
      %s84 = sphi 0, %s70
      %s90 = sphi 0, %s92
      %s93 = sphi 0, %s90
      %s94 = sphi 0, %s93
      %s110 = sphi 0, %s94
    $region4: #{tpu_custom_call.1} parent=1 // loop_header_branch
      %15 = sbr.rel (%p13) target = $region8
    $region5: #{tpu_custom_call.1} parent=1 // loop_body
      %s17 = ssub.s32 %s12, 1
      %s18 = ssub.s32 %s12, 2
      %s19 = sadd.s32 %s12, 1
      %s20 = ssub.s32 %s12, %s19
      %p21 = scmp.eq.s32.totalorder %s20, 0
      %s23 = sadd.s32 %s22, 1
      %s24 = scalar_select %p21, %s22, %s23
      %p27 = pneg %p21
      %p28 = scmp.eq.s32.totalorder %s12, 1
      %p29 = por %p27, %p28
      %p30 = scmp.ne.s32.totalorder %s22, %s25
      %p31 = scmp.eq.s32.totalorder %s12, 0
      %p32 = por %p30, %p31
      %p33 = scmp.ne.s32.totalorder %s22, %s25
      %p34 = scmp.eq.s32.totalorder %s17, 1
      %p35 = por %p33, %p34
      %p36 = scmp.ne.s32.totalorder %s25, %s26
      %p37 = scmp.eq.s32.totalorder %s17, 0
      %p38 = por %p36, %p37
      %p39 = scmp.ne.s32.totalorder %s25, %s26
      %p40 = scmp.eq.s32.totalorder %s18, 1
      %p41 = por %p39, %p40
      %p43 = scmp.ne.s32.totalorder %s26, %s42
      %p44 = scmp.eq.s32.totalorder %s18, 0
      %p45 = por %p43, %p44
      %s47 = sadd.s32 %s46, 1
      %p50 = scmp.eq.s32.totalorder %s12, 1
      %p51 = scmp.ne.s32.totalorder %s46, %s48
      %p52 = scmp.eq.s32.totalorder %s12, 0
      %p53 = por %p51, %p52
      %p54 = scmp.ne.s32.totalorder %s46, %s48
      %p55 = scmp.eq.s32.totalorder %s17, 1
      %p56 = por %p54, %p55
      %p57 = scmp.ne.s32.totalorder %s48, %s49
      %p58 = scmp.eq.s32.totalorder %s17, 0
      %p59 = por %p57, %p58
      %p60 = scmp.ne.s32.totalorder %s48, %s49
      %p61 = scmp.eq.s32.totalorder %s18, 1
      %p62 = por %p60, %p61
      %p64 = scmp.ne.s32.totalorder %s49, %s63
      %p65 = scmp.eq.s32.totalorder %s18, 0
      %p66 = por %p64, %p65
      %s68 = sadd.s32 %s67, 1
      %p71 = scmp.eq.s32.totalorder %s12, 1
      %p72 = scmp.ne.s32.totalorder %s67, %s69
      %p73 = scmp.eq.s32.totalorder %s12, 0
      %p74 = por %p72, %p73
      %p75 = scmp.ne.s32.totalorder %s67, %s69
      %p76 = scmp.eq.s32.totalorder %s17, 1
      %p77 = por %p75, %p76
      %p78 = scmp.ne.s32.totalorder %s69, %s70
      %p79 = scmp.eq.s32.totalorder %s17, 0
      %p80 = por %p78, %p79
      %p81 = scmp.ne.s32.totalorder %s69, %s70
      %p82 = scmp.eq.s32.totalorder %s18, 1
      %p83 = por %p81, %p82
      %p85 = scmp.ne.s32.totalorder %s70, %s84
      %p86 = scmp.eq.s32.totalorder %s18, 0
      %p87 = por %p85, %p86
      %s88 = ssub.s32 %s12, %s19
      %p89 = scmp.eq.s32.totalorder %s88, 0
      %s91 = sadd.s32 %s90, 1
      %s92 = scalar_select %p89, %s90, %s91
      %p95 = pneg %p89
      %p96 = scmp.eq.s32.totalorder %s12, 1
      %p97 = por %p95, %p96
      %p98 = scmp.ne.s32.totalorder %s90, %s93
      %p99 = scmp.eq.s32.totalorder %s12, 0
      %p100 = por %p98, %p99
      %p101 = scmp.ne.s32.totalorder %s90, %s93
      %p102 = scmp.eq.s32.totalorder %s17, 1
      %p103 = por %p101, %p102
      %p104 = scmp.ne.s32.totalorder %s93, %s94
      %p105 = scmp.eq.s32.totalorder %s17, 0
      %p106 = por %p104, %p105
      %p107 = scmp.ne.s32.totalorder %s93, %s94
      %p108 = scmp.eq.s32.totalorder %s18, 1
      %p109 = por %p107, %p108
      %p111 = scmp.ne.s32.totalorder %s94, %s110
      %p112 = scmp.eq.s32.totalorder %s18, 0
      %p113 = por %p111, %p112
      %p114 = scmp.le.s32.totalorder 1, %s12
      %p115 = scmp.lt.s32.totalorder %s12, 3
      %p116 = pnand %p114, %p115
      %p117 = pneg %p116
      // Predicated region
      $region9: #{tpu_custom_call.1} parent=5 // pred_check
        _
      $region10: #{tpu_custom_call.1} parent=5 // pred_check_branch
        %119 = sbr.rel (%p116) target = $region12
      $region11: #{tpu_custom_call.1} parent=5 // pred_region
        %s120 = ssub.s32 %s12, 1
        // Predicated region
        $region13: #{tpu_custom_call.1} parent=11 // pred_check
          %p121 = pneg %p59
        $region14: #{tpu_custom_call.1} parent=11 // pred_check_branch
          %123 = sbr.rel (%p121) target = $region16
        $region15: #{tpu_custom_call.1} parent=11 // pred_region
          _
        $region16: #{tpu_custom_call.1} parent=11 // pred_fallthru
          _
        // Predicated region
        $region17: #{tpu_custom_call.1} parent=11 // pred_check
          %p124 = pneg %p80
        $region18: #{tpu_custom_call.1} parent=11 // pred_check_branch
          %126 = sbr.rel (%p124) target = $region20
        $region19: #{tpu_custom_call.1} parent=11 // pred_region
          _
        $region20: #{tpu_custom_call.1} parent=11 // pred_fallthru
          _
      $region12: #{tpu_custom_call.1} parent=5 // pred_fallthru
        _
      %p127 = scmp.lt.s32.totalorder %s12, 2
      // Predicated region
      $region21: #{tpu_custom_call.1} parent=5 // pred_check
        %p128 = pneg %p127
      $region22: #{tpu_custom_call.1} parent=5 // pred_check_branch
        %130 = sbr.rel (%p128) target = $region24
      $region23: #{tpu_custom_call.1} parent=5 // pred_region
        // Predicated region
        $region25: #{tpu_custom_call.1} parent=23 // pred_check
          %p131 = pneg %p32
        $region26: #{tpu_custom_call.1} parent=23 // pred_check_branch
          %133 = sbr.rel (%p131) target = $region28
        $region27: #{tpu_custom_call.1} parent=23 // pred_region
          %s134 = smul.u32 32, %s12
          %p135 = scmp.lt.s32.totalorder %s134, 63
          %s136 = scalar_select %p135, %s134, 63
          %s137 = smul.addr %s136, 8
          %s138 = scalar_lea.vmem %s0, %s137
          %s139 = smul.u32 32, %s12
        $region28: #{tpu_custom_call.1} parent=23 // pred_fallthru
          _
      $region24: #{tpu_custom_call.1} parent=5 // pred_fallthru
        _
      %p140 = scmp.le.s32.totalorder 1, %s12
      %p141 = scmp.lt.s32.totalorder %s12, 3
      %p142 = pnand %p140, %p141
      %p143 = pneg %p142
      // Predicated region
      $region29: #{tpu_custom_call.1} parent=5 // pred_check
        _
      $region30: #{tpu_custom_call.1} parent=5 // pred_check_branch
        %145 = sbr.rel (%p142) target = $region32
      $region31: #{tpu_custom_call.1} parent=5 // pred_region
        %s146 = ssub.s32 %s12, 1
        %s147 = smul.u32 32, %s17
        %p148 = scmp.lt.s32.totalorder %s147, 63
        %s149 = scalar_select %p148, %s147, 63
        %s150 = smul.addr %s149, 8
        %s151 = scalar_lea.vmem %s0, %s150
        %p152 = pneg %p38
        %p153 = pneg %p35
        %p154 = pneg %p59
        %p155 = pneg %p56
        %p156 = pneg %p80
        %p157 = pneg %p77
        %p158 = pneg %p106
        %p159 = pneg %p103
        %s160 = sand.u32 %s93, 1
        %s161 = scalar_lea.sflag [#allocation3], %s160
        %s162 = sand.u32 %s93, 1
        %s163 = smul.addr %s162, 128
        %s164 = scalar_lea.vmem [#allocation2], %s163
        %s165 = smul.u32 32, %s17
        %p166 = scmp.lt.s32.totalorder %s165, 63
        %s167 = scalar_select %p166, %s165, 63
        %s168 = smul.addr %s167, 8
        %s169 = scalar_lea.vmem %s0, %s168
        %s170 = smul.u32 32, %s17
        %s171 = smul.u32 32, %s17
        %v173 = vld [vmem:[%s169] sm:$0xff]
        %v174 = vld [vmem:[%s169 + $0x8] sm:$0xff]
        %v175 = vld [vmem:[%s169 + $0x10] sm:$0xff]
        %v176 = vld [vmem:[%s169 + $0x18] sm:$0xff]
        %v177 = vld [vmem:[%s169 + $0x20] sm:$0xff]
        %v178 = vld [vmem:[%s169 + $0x28] sm:$0xff]
        %v179 = vld [vmem:[%s169 + $0x30] sm:$0xff]
        %v180 = vld [vmem:[%s169 + $0x38] sm:$0xff]
        %v181 = vld [vmem:[%s169 + $0x40] sm:$0xff]
        %v182 = vld [vmem:[%s169 + $0x48] sm:$0xff]
        %v183 = vld [vmem:[%s169 + $0x50] sm:$0xff]
        %v184 = vld [vmem:[%s169 + $0x58] sm:$0xff]
        %v185 = vld [vmem:[%s169 + $0x60] sm:$0xff]
        %v186 = vld [vmem:[%s169 + $0x68] sm:$0xff]
        %v187 = vld [vmem:[%s169 + $0x70] sm:$0xff]
        %v188 = vld [vmem:[%s169 + $0x78] sm:$0xff]
        %v189 = vld [vmem:[%s169 + $0x80] sm:$0xff]
        %v190 = vld [vmem:[%s169 + $0x88] sm:$0xff]
        %v191 = vld [vmem:[%s169 + $0x90] sm:$0xff]
        %v192 = vld [vmem:[%s169 + $0x98] sm:$0xff]
        %v193 = vld [vmem:[%s169 + $0xa0] sm:$0xff]
        %v194 = vld [vmem:[%s169 + $0xa8] sm:$0xff]
        %v195 = vld [vmem:[%s169 + $0xb0] sm:$0xff]
        %v196 = vld [vmem:[%s169 + $0xb8] sm:$0xff]
        %v197 = vld [vmem:[%s169 + $0xc0] sm:$0xff]
        %v198 = vld [vmem:[%s169 + $0xc8] sm:$0xff]
        %v199 = vld [vmem:[%s169 + $0xd0] sm:$0xff]
        %v200 = vld [vmem:[%s169 + $0xd8] sm:$0xff]
        %v201 = vld [vmem:[%s169 + $0xe0] sm:$0xff]
        %v202 = vld [vmem:[%s169 + $0xe8] sm:$0xff]
        %v203 = vld [vmem:[%s169 + $0xf0] sm:$0xff]
        %v204 = vld [vmem:[%s169 + $0xf8] sm:$0xff]
        %v205 = vpack.c.bf16 %v174, %v173
        %v206 = vpack.c.bf16 %v176, %v175
        %v207 = vpack.c.bf16 %v178, %v177
        %v208 = vpack.c.bf16 %v180, %v179
        %v209 = vpack.c.bf16 %v182, %v181
        %v210 = vpack.c.bf16 %v184, %v183
        %v211 = vpack.c.bf16 %v186, %v185
        %v212 = vpack.c.bf16 %v188, %v187
        %v213 = vpack.c.bf16 %v190, %v189
        %v214 = vpack.c.bf16 %v192, %v191
        %v215 = vpack.c.bf16 %v194, %v193
        %v216 = vpack.c.bf16 %v196, %v195
        %v217 = vpack.c.bf16 %v198, %v197
        %v218 = vpack.c.bf16 %v200, %v199
        %v219 = vpack.c.bf16 %v202, %v201
        %v220 = vpack.c.bf16 %v204, %v203
        %v221 = vld [vmem:[%s1] sm:$0x3]
        %v222 = vld [vmem:[%s2] sm:$0x1]
        %v224 = vlaneseq
        %v225 = vshrl.u32 %v224, 7
        %v226 = vsub.s32 0, %v225
        %v227 = vrot.slane %v222, %v226
        %vm229 = vcmask 31744
        %v231 = vsel %vm229, %v205, 0
        %v234 = vsel %vm229, %v206, 0
        %v237 = vsel %vm229, %v207, 0
        %v240 = vsel %vm229, %v208, 0
        %v243 = vsel %vm229, %v209, 0
        %v246 = vsel %vm229, %v210, 0
        %v249 = vsel %vm229, %v211, 0
        %v252 = vsel %vm229, %v212, 0
        %v255 = vsel %vm229, %v213, 0
        %v258 = vsel %vm229, %v214, 0
        %v261 = vsel %vm229, %v215, 0
        %v264 = vsel %vm229, %v216, 0
        %v267 = vsel %vm229, %v217, 0
        %v270 = vsel %vm229, %v218, 0
        %v273 = vsel %vm229, %v219, 0
        %v276 = vsel %vm229, %v220, 0
        %vm278 = vcmask 1041408
        %v280 = vsel %vm278, %v221, 0
        %282 = vmatprep.subr.bf16.mxu0 0
        %283 = vmatpush1.bf16.msra.mxu0 %v280
        %284 = vmatprep.subr.bf16.mxu0 0
        %285 = vmatpush1.bf16.msra.mxu0 0
        %286 = vmatprep.subr.bf16.mxu0 0
        %287 = vmatpush1.bf16.msra.mxu0 0
        %288 = vmatprep.subr.bf16.mxu0 0
        %289 = vmatpush1.bf16.msra.mxu0 0
        %290 = vmatprep.subr.bf16.mxu0 0
        %291 = vmatpush1.bf16.msra.mxu0 0
        %292 = vmatprep.subr.bf16.mxu0 0
        %293 = vmatpush1.bf16.msra.mxu0 0
        %294 = vmatprep.subr.bf16.mxu0 0
        %295 = vmatpush1.bf16.msra.mxu0 0
        %296 = vmatprep.subr.bf16.mxu0 0
        %297 = vmatpush1.bf16.msra.mxu0 0
        %298 = vmatprep.subr.bf16.mxu0 0
        %299 = vmatpush1.bf16.msra.mxu0 0
        %300 = vmatprep.subr.bf16.mxu0 0
        %301 = vmatpush1.bf16.msra.mxu0 0
        %302 = vmatprep.subr.bf16.mxu0 0
        %303 = vmatpush1.bf16.msra.mxu0 0
        %304 = vmatprep.subr.bf16.mxu0 0
        %305 = vmatpush1.bf16.msra.mxu0 0
        %306 = vmatprep.subr.bf16.mxu0 0
        %307 = vmatpush1.bf16.msra.mxu0 0
        %308 = vmatprep.subr.bf16.mxu0 0
        %309 = vmatpush1.bf16.msra.mxu0 0
        %310 = vmatprep.subr.bf16.mxu0 0
        %311 = vmatpush1.bf16.msra.mxu0 0
        %312 = vmatprep.subr.bf16.mxu0 0
        %313 = vmatpush1.bf16.msra.mxu0 0
        %314 = vmatprep.mubr.bf16.mxu0 0
        %315 = vmatmul.mubr.bf16.gmra.mrb[0].mxu0 %v231
        %v316 = vpop.f32.mrb[0].mxu0
        %v317 = vadd.f32 %v227, %v316
        %v318 = vpop.f32.mrb[0].mxu0
        %v319 = vpop.f32.mrb[0].mxu0
        %v320 = vadd.f32 %v227, %v319
        %v321 = vpop.f32.mrb[0].mxu0
        %322 = vmatprep.mubr.bf16.mxu0 0
        %323 = vmatmul.mubr.bf16.gmra.mrb[0].mxu0 %v234
        %v324 = vpop.f32.mrb[0].mxu0
        %v325 = vadd.f32 %v227, %v324
        %v326 = vpop.f32.mrb[0].mxu0
        %v327 = vpop.f32.mrb[0].mxu0
        %v328 = vadd.f32 %v227, %v327
        %v329 = vpop.f32.mrb[0].mxu0
        %330 = vmatprep.mubr.bf16.mxu0 0
        %331 = vmatmul.mubr.bf16.gmra.mrb[0].mxu0 %v237
        %v332 = vpop.f32.mrb[0].mxu0
        %v333 = vadd.f32 %v227, %v332
        %v334 = vpop.f32.mrb[0].mxu0
        %v335 = vpop.f32.mrb[0].mxu0
        %v336 = vadd.f32 %v227, %v335
        %v337 = vpop.f32.mrb[0].mxu0
        %338 = vmatprep.mubr.bf16.mxu0 0
        %339 = vmatmul.mubr.bf16.gmra.mrb[0].mxu0 %v240
        %v340 = vpop.f32.mrb[0].mxu0
        %v341 = vadd.f32 %v227, %v340
        %v342 = vpop.f32.mrb[0].mxu0
        %v343 = vpop.f32.mrb[0].mxu0
        %v344 = vadd.f32 %v227, %v343
        %v345 = vpop.f32.mrb[0].mxu0
        %346 = vmatprep.mubr.bf16.mxu0 0
        %347 = vmatmul.mubr.bf16.gmra.mrb[0].mxu0 %v243
        %v348 = vpop.f32.mrb[0].mxu0
        %v349 = vadd.f32 %v227, %v348
        %v350 = vpop.f32.mrb[0].mxu0
        %v351 = vpop.f32.mrb[0].mxu0
        %v352 = vadd.f32 %v227, %v351
        %v353 = vpop.f32.mrb[0].mxu0
        %354 = vmatprep.mubr.bf16.mxu0 0
        %355 = vmatmul.mubr.bf16.gmra.mrb[0].mxu0 %v246
        %v356 = vpop.f32.mrb[0].mxu0
        %v357 = vadd.f32 %v227, %v356
        %v358 = vpop.f32.mrb[0].mxu0
        %v359 = vpop.f32.mrb[0].mxu0
        %v360 = vadd.f32 %v227, %v359
        %v361 = vpop.f32.mrb[0].mxu0
        %362 = vmatprep.mubr.bf16.mxu0 0
        %363 = vmatmul.mubr.bf16.gmra.mrb[0].mxu0 %v249
        %v364 = vpop.f32.mrb[0].mxu0
        %v365 = vadd.f32 %v227, %v364
        %v366 = vpop.f32.mrb[0].mxu0
        %v367 = vpop.f32.mrb[0].mxu0
        %v368 = vadd.f32 %v227, %v367
        %v369 = vpop.f32.mrb[0].mxu0
        %370 = vmatprep.mubr.bf16.mxu0 0
        %371 = vmatmul.mubr.bf16.gmra.mrb[0].mxu0 %v252
        %v372 = vpop.f32.mrb[0].mxu0
        %v373 = vadd.f32 %v227, %v372
        %v374 = vpop.f32.mrb[0].mxu0
        %v375 = vpop.f32.mrb[0].mxu0
        %v376 = vadd.f32 %v227, %v375
        %v377 = vpop.f32.mrb[0].mxu0
        %378 = vmatprep.mubr.bf16.mxu0 0
        %379 = vmatmul.mubr.bf16.gmra.mrb[0].mxu0 %v255
        %v380 = vpop.f32.mrb[0].mxu0
        %v381 = vadd.f32 %v227, %v380
        %v382 = vpop.f32.mrb[0].mxu0
        %v383 = vpop.f32.mrb[0].mxu0
        %v384 = vadd.f32 %v227, %v383
        %v385 = vpop.f32.mrb[0].mxu0
        %386 = vmatprep.mubr.bf16.mxu0 0
        %387 = vmatmul.mubr.bf16.gmra.mrb[0].mxu0 %v258
        %v388 = vpop.f32.mrb[0].mxu0
        %v389 = vadd.f32 %v227, %v388
        %v390 = vpop.f32.mrb[0].mxu0
        %v391 = vpop.f32.mrb[0].mxu0
        %v392 = vadd.f32 %v227, %v391
        %v393 = vpop.f32.mrb[0].mxu0
        %394 = vmatprep.mubr.bf16.mxu0 0
        %395 = vmatmul.mubr.bf16.gmra.mrb[0].mxu0 %v261
        %v396 = vpop.f32.mrb[0].mxu0
        %v397 = vadd.f32 %v227, %v396
        %v398 = vpop.f32.mrb[0].mxu0
        %v399 = vpop.f32.mrb[0].mxu0
        %v400 = vadd.f32 %v227, %v399
        %v401 = vpop.f32.mrb[0].mxu0
        %402 = vmatprep.mubr.bf16.mxu0 0
        %403 = vmatmul.mubr.bf16.gmra.mrb[0].mxu0 %v264
        %v404 = vpop.f32.mrb[0].mxu0
        %v405 = vadd.f32 %v227, %v404
        %v406 = vpop.f32.mrb[0].mxu0
        %v407 = vpop.f32.mrb[0].mxu0
        %v408 = vadd.f32 %v227, %v407
        %v409 = vpop.f32.mrb[0].mxu0
        %410 = vmatprep.mubr.bf16.mxu0 0
        %411 = vmatmul.mubr.bf16.gmra.mrb[0].mxu0 %v267
        %v412 = vpop.f32.mrb[0].mxu0
        %v413 = vadd.f32 %v227, %v412
        %v414 = vpop.f32.mrb[0].mxu0
        %v415 = vpop.f32.mrb[0].mxu0
        %v416 = vadd.f32 %v227, %v415
        %v417 = vpop.f32.mrb[0].mxu0
        %418 = vmatprep.mubr.bf16.mxu0 0
        %419 = vmatmul.mubr.bf16.gmra.mrb[0].mxu0 %v270
        %v420 = vpop.f32.mrb[0].mxu0
        %v421 = vadd.f32 %v227, %v420
        %v422 = vpop.f32.mrb[0].mxu0
        %v423 = vpop.f32.mrb[0].mxu0
        %v424 = vadd.f32 %v227, %v423
        %v425 = vpop.f32.mrb[0].mxu0
        %426 = vmatprep.mubr.bf16.mxu0 0
        %427 = vmatmul.mubr.bf16.gmra.mrb[0].mxu0 %v273
        %v428 = vpop.f32.mrb[0].mxu0
        %v429 = vadd.f32 %v227, %v428
        %v430 = vpop.f32.mrb[0].mxu0
        %v431 = vpop.f32.mrb[0].mxu0
        %v432 = vadd.f32 %v227, %v431
        %v433 = vpop.f32.mrb[0].mxu0
        %434 = vmatprep.mubr.bf16.mxu0 0
        %435 = vmatmul.mubr.bf16.gmra.mrb[0].mxu0 %v276
        %v436 = vpop.f32.mrb[0].mxu0
        %v437 = vadd.f32 %v227, %v436
        %v438 = vpop.f32.mrb[0].mxu0
        %v439 = vpop.f32.mrb[0].mxu0
        %v440 = vadd.f32 %v227, %v439
        %v441 = vpop.f32.mrb[0].mxu0
        %442 = vdwg.mxu0
        %v443 = vpack.c.bf16 %v320, %v317
        %v444 = vpack.c.bf16 %v328, %v325
        %v445 = vpack.c.bf16 %v336, %v333
        %v446 = vpack.c.bf16 %v344, %v341
        %v447 = vpack.c.bf16 %v352, %v349
        %v448 = vpack.c.bf16 %v360, %v357
        %v449 = vpack.c.bf16 %v368, %v365
        %v450 = vpack.c.bf16 %v376, %v373
        %v451 = vpack.c.bf16 %v384, %v381
        %v452 = vpack.c.bf16 %v392, %v389
        %v453 = vpack.c.bf16 %v400, %v397
        %v454 = vpack.c.bf16 %v408, %v405
        %v455 = vpack.c.bf16 %v416, %v413
        %v456 = vpack.c.bf16 %v424, %v421
        %v457 = vpack.c.bf16 %v432, %v429
        %v458 = vpack.c.bf16 %v440, %v437
        %v475 = vunpack.c.l.b16 %v443
        %v476 = vunpack.c.h.b16 %v443
        %v477 = vunpack.c.l.b16 %v444
        %v478 = vunpack.c.h.b16 %v444
        %v479 = vunpack.c.l.b16 %v445
        %v480 = vunpack.c.h.b16 %v445
        %v481 = vunpack.c.l.b16 %v446
        %v482 = vunpack.c.h.b16 %v446
        %v483 = vunpack.c.l.b16 %v447
        %v484 = vunpack.c.h.b16 %v447
        %v485 = vunpack.c.l.b16 %v448
        %v486 = vunpack.c.h.b16 %v448
        %v487 = vunpack.c.l.b16 %v449
        %v488 = vunpack.c.h.b16 %v449
        %v489 = vunpack.c.l.b16 %v450
        %v490 = vunpack.c.h.b16 %v450
        %v491 = vunpack.c.l.b16 %v451
        %v492 = vunpack.c.h.b16 %v451
        %v493 = vunpack.c.l.b16 %v452
        %v494 = vunpack.c.h.b16 %v452
        %v495 = vunpack.c.l.b16 %v453
        %v496 = vunpack.c.h.b16 %v453
        %v497 = vunpack.c.l.b16 %v454
        %v498 = vunpack.c.h.b16 %v454
        %v499 = vunpack.c.l.b16 %v455
        %v500 = vunpack.c.h.b16 %v455
        %v501 = vunpack.c.l.b16 %v456
        %v502 = vunpack.c.h.b16 %v456
        %v503 = vunpack.c.l.b16 %v457
        %v504 = vunpack.c.h.b16 %v457
        %v505 = vunpack.c.l.b16 %v458
        %v506 = vunpack.c.h.b16 %v458
        %v507 = vpack.c.b16 %v475, %v475
        %v508 = vpack.c.b16 %v476, %v476
        %v509 = vpack.c.b16 %v477, %v477
        %v510 = vpack.c.b16 %v478, %v478
        %v511 = vpack.c.b16 %v479, %v479
        %v512 = vpack.c.b16 %v480, %v480
        %v513 = vpack.c.b16 %v481, %v481
        %v514 = vpack.c.b16 %v482, %v482
        %v515 = vpack.c.b16 %v483, %v483
        %v516 = vpack.c.b16 %v484, %v484
        %v517 = vpack.c.b16 %v485, %v485
        %v518 = vpack.c.b16 %v486, %v486
        %v519 = vpack.c.b16 %v487, %v487
        %v520 = vpack.c.b16 %v488, %v488
        %v521 = vpack.c.b16 %v489, %v489
        %v522 = vpack.c.b16 %v490, %v490
        %v523 = vpack.c.b16 %v491, %v491
        %v524 = vpack.c.b16 %v492, %v492
        %v525 = vpack.c.b16 %v493, %v493
        %v526 = vpack.c.b16 %v494, %v494
        %v527 = vpack.c.b16 %v495, %v495
        %v528 = vpack.c.b16 %v496, %v496
        %v529 = vpack.c.b16 %v497, %v497
        %v530 = vpack.c.b16 %v498, %v498
        %v531 = vpack.c.b16 %v499, %v499
        %v532 = vpack.c.b16 %v500, %v500
        %v533 = vpack.c.b16 %v501, %v501
        %v534 = vpack.c.b16 %v502, %v502
        %v535 = vpack.c.b16 %v503, %v503
        %v536 = vpack.c.b16 %v504, %v504
        %v537 = vpack.c.b16 %v505, %v505
        %v538 = vpack.c.b16 %v506, %v506
        %571 = vst [vmem:[%s164] sm:$0xf] %v507
        %572 = vst [vmem:[%s164 + $0x4] sm:$0xf] %v508
        %573 = vst [vmem:[%s164 + $0x8] sm:$0xf] %v509
        %574 = vst [vmem:[%s164 + $0xc] sm:$0xf] %v510
        %575 = vst [vmem:[%s164 + $0x10] sm:$0xf] %v511
        %576 = vst [vmem:[%s164 + $0x14] sm:$0xf] %v512
        %577 = vst [vmem:[%s164 + $0x18] sm:$0xf] %v513
        %578 = vst [vmem:[%s164 + $0x1c] sm:$0xf] %v514
        %579 = vst [vmem:[%s164 + $0x20] sm:$0xf] %v515
        %580 = vst [vmem:[%s164 + $0x24] sm:$0xf] %v516
        %581 = vst [vmem:[%s164 + $0x28] sm:$0xf] %v517
        %582 = vst [vmem:[%s164 + $0x2c] sm:$0xf] %v518
        %583 = vst [vmem:[%s164 + $0x30] sm:$0xf] %v519
        %584 = vst [vmem:[%s164 + $0x34] sm:$0xf] %v520
        %585 = vst [vmem:[%s164 + $0x38] sm:$0xf] %v521
        %586 = vst [vmem:[%s164 + $0x3c] sm:$0xf] %v522
        %587 = vst [vmem:[%s164 + $0x40] sm:$0xf] %v523
        %588 = vst [vmem:[%s164 + $0x44] sm:$0xf] %v524
        %589 = vst [vmem:[%s164 + $0x48] sm:$0xf] %v525
        %590 = vst [vmem:[%s164 + $0x4c] sm:$0xf] %v526
        %591 = vst [vmem:[%s164 + $0x50] sm:$0xf] %v527
        %592 = vst [vmem:[%s164 + $0x54] sm:$0xf] %v528
        %593 = vst [vmem:[%s164 + $0x58] sm:$0xf] %v529
        %594 = vst [vmem:[%s164 + $0x5c] sm:$0xf] %v530
        %595 = vst [vmem:[%s164 + $0x60] sm:$0xf] %v531
        %596 = vst [vmem:[%s164 + $0x64] sm:$0xf] %v532
        %597 = vst [vmem:[%s164 + $0x68] sm:$0xf] %v533
        %598 = vst [vmem:[%s164 + $0x6c] sm:$0xf] %v534
        %599 = vst [vmem:[%s164 + $0x70] sm:$0xf] %v535
        %600 = vst [vmem:[%s164 + $0x74] sm:$0xf] %v536
        %601 = vst [vmem:[%s164 + $0x78] sm:$0xf] %v537
        %602 = vst [vmem:[%s164 + $0x7c] sm:$0xf] %v538
        %s603 = sand.u32 %s93, 1
        %s604 = scalar_lea.sflag [#allocation3], %s603
        %s605 = sand.u32 %s93, 1
        %s606 = smul.addr %s605, 128
        %s607 = scalar_lea.vmem [#allocation2], %s606
        // Predicated region
        $region33: #{tpu_custom_call.1} parent=31 // pred_check
          %p608 = pneg %p103
        $region34: #{tpu_custom_call.1} parent=31 // pred_check_branch
          %610 = sbr.rel (%p608) target = $region36
        $region35: #{tpu_custom_call.1} parent=31 // pred_region
          %s611 = smul.u32 32, %s17
          %s613 = ssub.s32 2048, 2048
          %614 = vsyncadd %s604, %s613
          %s615 = smul.addr %s611, 64
          %s616 = scalar_lea.hbm %s3, %s615
          %s617 = sshll.u32 %s607, 4
          %s618 = int_to_ptr.vmem [resolvable:$true] %s617
          %623 = dma.vmem_to_hbm [thread:$0]  %s618, 2048, %s616, %s604, 64, 64, 4
        $region36: #{tpu_custom_call.1} parent=31 // pred_fallthru
          _
      $region32: #{tpu_custom_call.1} parent=5 // pred_fallthru
        _
      %p624 = scmp.le.s32.totalorder 2, %s12
      // Predicated region
      $region37: #{tpu_custom_call.1} parent=5 // pred_check
        %p625 = pneg %p624
      $region38: #{tpu_custom_call.1} parent=5 // pred_check_branch
        %627 = sbr.rel (%p625) target = $region40
      $region39: #{tpu_custom_call.1} parent=5 // pred_region
        %s628 = ssub.s32 %s12, 2
        // Predicated region
        $region41: #{tpu_custom_call.1} parent=39 // pred_check
          %p629 = pneg %p109
        $region42: #{tpu_custom_call.1} parent=39 // pred_check_branch
          %631 = sbr.rel (%p629) target = $region44
        $region43: #{tpu_custom_call.1} parent=39 // pred_region
          %s632 = sand.u32 %s94, 1
          %s633 = scalar_lea.sflag [#allocation3], %s632
          %s634 = sand.u32 %s94, 1
          %s635 = smul.addr %s634, 128
          %s636 = scalar_lea.vmem [#allocation2], %s635
          %637 = dma.done %s633, 2048
        $region44: #{tpu_custom_call.1} parent=39 // pred_fallthru
          _
      $region40: #{tpu_custom_call.1} parent=5 // pred_fallthru
        _
    $region6: #{tpu_custom_call.1} parent=1 // loop_footer
      %s16 = sadd.s32 1, %s12
    $region7: #{tpu_custom_call.1} parent=1 // loop_footer_branch
      %11 = sbr.rel target = $region3
    $region8: #{tpu_custom_call.1} parent=1 // loop_exit
      _
    %638 = vsyncpa [#allocation3], 1
    %s639 = scalar_lea.sflag [#allocation3], 1
    %640 = vsyncpa %s639, 1

</llo_original>
